<compile_context>
chip_gen: v7x
topology: tpu7x:2x2x1
jax: 0.10.0
libtpu: 0.0.40
codegen_flags: <defaults>
</compile_context>

<pallas_src>
import functools

import jax
import jax.numpy as jnp
from jax import lax
from jax.experimental import pallas as pl
from jax.experimental.pallas import tpu as pltpu

_LANE = 128


def _round_up(a, b):
    return (a + b - 1) // b * b


def _largest_divisor_leq(n, cap):
    cap = max(1, min(n, cap))
    for d in range(cap, 0, -1):
        if n % d == 0:
            return d
    return 1


def _fusion_kernel(x_ref, w_ref, shift_ref, o_ref, acc_ref, *, cb):
    # x_ref:     (1, CB, TT, V)      input tile, native NCTV layout
    # w_ref:     (CB, V, C_out_pad)  conv weight chunk (BN scale pre-folded)
    # shift_ref: (1, C_out_pad)      folded conv-bias + BN shift (f32)
    # o_ref:     (1, TT, C_out_pad)  lane-dense output tile
    # acc_ref:   (TT, C_out_pad) f32 scratch, carried across the C_in-chunk axis
    c = pl.program_id(2)

    @pl.when(c == 0)
    def _init():
        acc_ref[...] = jnp.zeros_like(acc_ref)

    def body(j, acc):
        # (TT, V) @ (V, C_out_pad) on the MXU with f32 accumulation.
        return acc + jnp.dot(x_ref[0, j], w_ref[j],
                             preferred_element_type=jnp.float32)

    acc_ref[...] = lax.fori_loop(0, cb, body, acc_ref[...], unroll=cb <= 8)

    @pl.when(c == pl.num_programs(2) - 1)
    def _finalize():
        y = acc_ref[...] + shift_ref[...]          # (TT,Cp) + (1,Cp) broadcast
        o_ref[0] = jnp.maximum(y, 0.0).astype(o_ref.dtype)


def vertices_fusion(x, conv_w, conv_b, bn_gamma, bn_beta, bn_mean, bn_var,
                    eps=1e-5, compute_dtype=jnp.float32,
                    time_tile=512, x_block_budget_bytes=4 << 20):
    """x: (N, C_in, T, V) -> (N, C_out, T).  Conv2d(k=(1,V)) + eval-BN + ReLU."""
    N, C_in, T, V = x.shape
    C_out = conv_w.shape[0]
    C_out_pad = _round_up(C_out, _LANE)

    # ---- glue: fold conv bias + eval-mode BN into per-channel scale/shift ----
    scale = bn_gamma / jnp.sqrt(bn_var + eps)                 # (C_out,)
    shift = bn_beta + (conv_b - bn_mean) * scale              # (C_out,)
    w = conv_w[:, :, 0, :] * scale[:, None, None]             # scale folded into W
    w = jnp.transpose(w, (1, 2, 0))                           # (C_in, V, C_out) (tiny)
    w = jnp.pad(w, ((0, 0), (0, 0), (0, C_out_pad - C_out)))  # lane-dense weight
    shift_p = jnp.pad(shift, (0, C_out_pad - C_out)).reshape(1, C_out_pad)
    shift_p = shift_p.astype(jnp.float32)

    x_c = x.astype(compute_dtype)
    w_c = w.astype(compute_dtype)

    # ---- tile sizing (fits the smallest generation, v7x 64 MiB VMEM) ----
    itemsize = jnp.dtype(compute_dtype).itemsize
    TT = min(_round_up(time_tile, 8), _round_up(T, 8))        # rows per tile
    per_chan_vmem = TT * _round_up(V, _LANE) * itemsize       # V is lane-padded in VMEM
    cb_cap = max(1, x_block_budget_bytes // per_chan_vmem)
    CB = _largest_divisor_leq(C_in, cb_cap)                   # exact division: no masking
    n_t = pl.cdiv(T, TT)
    n_c = C_in // CB
    grid = (N, n_t, n_c)

    # VMEM estimate (double-buffered inputs/outputs + accumulator), with headroom.
    x_blk = CB * per_chan_vmem
    w_blk = CB * _round_up(V, 8) * C_out_pad * itemsize
    o_blk = TT * C_out_pad * 4
    sh_blk = 8 * C_out_pad * 4
    est = 2 * (x_blk + w_blk + o_blk + sh_blk) + o_blk
    vmem_limit = int(min(max(2 * est, 32 << 20), 48 << 20))

    kernel = functools.partial(_fusion_kernel, cb=CB)

    out_pad = pl.pallas_call(
        kernel,
        out_shape=jax.ShapeDtypeStruct((N, T, C_out_pad), jnp.float32),
        grid=grid,
        in_specs=[
            # x read in its native layout: no XLA transpose of the big tensor.
            pl.BlockSpec((1, CB, TT, V), lambda n, t, c: (n, c, t, 0)),
            pl.BlockSpec((CB, V, C_out_pad), lambda n, t, c: (c, 0, 0)),
            pl.BlockSpec((1, C_out_pad), lambda n, t, c: (0, 0)),  # fetched once
        ],
        out_specs=pl.BlockSpec((1, TT, C_out_pad), lambda n, t, c: (n, t, 0)),
        scratch_shapes=[pltpu.VMEM((TT, C_out_pad), jnp.float32)],
        compiler_params=pltpu.CompilerParams(
            dimension_semantics=("parallel", "parallel", "arbitrary"),
            vmem_limit_bytes=vmem_limit),
    )(x_c, w_c, shift_p)

    # (N, T, C_out_pad) -> (N, C_out, T): slice+transpose of the *small* output
    # (cheap; the expensive input-side transpose was eliminated).
    return jnp.transpose(out_pad[:, :, :C_out], (0, 2, 1))


def _reference(x, conv_w, conv_b, bn_gamma, bn_beta, bn_mean, bn_var, eps=1e-5):
    # pure-JAX reference: conv(1,V) + eval-mode BN + ReLU
    y = jnp.einsum("ncts,ocs->not", x, conv_w[:, :, 0, :]) + conv_b[None, :, None]
    y = (y - bn_mean[None, :, None]) / jnp.sqrt(bn_var[None, :, None] + eps)
    y = y * bn_gamma[None, :, None] + bn_beta[None, :, None]
    return jnp.maximum(y, 0.0)


if __name__ == "__main__":
    # small shapes consistent with the module (node_nums=18 default)
    N, C_in, T, V = 2, 4, 16, 18
    C_out = 8

    key = jax.random.PRNGKey(0)
    kx, kw, kb, kg, kbt, km, kv = jax.random.split(key, 7)

    x = jax.random.normal(kx, (N, C_in, T, V), dtype=jnp.float32)
    conv_w = 0.1 * jax.random.normal(kw, (C_out, C_in, 1, V), dtype=jnp.float32)
    conv_b = 0.1 * jax.random.normal(kb, (C_out,), dtype=jnp.float32)
    bn_gamma = 1.0 + 0.05 * jax.random.normal(kg, (C_out,), dtype=jnp.float32)
    bn_beta = 0.05 * jax.random.normal(kbt, (C_out,), dtype=jnp.float32)
    bn_mean = 0.05 * jax.random.normal(km, (C_out,), dtype=jnp.float32)
    bn_var = jnp.abs(1.0 + 0.05 * jax.random.normal(kv, (C_out,), dtype=jnp.float32))
    # TODO(synk): training-mode (batch-statistics) BatchNorm1d not implemented;
    # kernel uses eval-mode running stats folded into scale/shift.

    ref = _reference(x, conv_w, conv_b, bn_gamma, bn_beta, bn_mean, bn_var)

    # 1) float32 compute path
    out = jax.block_until_ready(
        vertices_fusion(x, conv_w, conv_b, bn_gamma, bn_beta, bn_mean, bn_var))
    assert out.shape == (N, C_out, T)
    assert jnp.allclose(out, ref, atol=1e-4, rtol=1e-4)

    # 2) bfloat16 compute path (halves HBM traffic for x/w; f32 accumulate)
    out_bf16 = jax.block_until_ready(
        vertices_fusion(x, conv_w, conv_b, bn_gamma, bn_beta, bn_mean, bn_var,
                        compute_dtype=jnp.bfloat16))
    assert jnp.allclose(out_bf16, ref, atol=5e-2, rtol=5e-2)

    # 3) non-divisible T + multi-chunk C_in (exercises accumulator + edge masking)
    N2, C2, T2, V2, CO2 = 2, 6, 20, 18, 8
    k2 = jax.random.split(jax.random.PRNGKey(1), 7)
    x2 = jax.random.normal(k2[0], (N2, C2, T2, V2), dtype=jnp.float32)
    w2 = 0.1 * jax.random.normal(k2[1], (CO2, C2, 1, V2), dtype=jnp.float32)
    b2 = 0.1 * jax.random.normal(k2[2], (CO2,), dtype=jnp.float32)
    g2 = 1.0 + 0.05 * jax.random.normal(k2[3], (CO2,), dtype=jnp.float32)
    bt2 = 0.05 * jax.random.normal(k2[4], (CO2,), dtype=jnp.float32)
    m2 = 0.05 * jax.random.normal(k2[5], (CO2,), dtype=jnp.float32)
    v2 = jnp.abs(1.0 + 0.05 * jax.random.normal(k2[6], (CO2,), dtype=jnp.float32))
    out2 = jax.block_until_ready(
        vertices_fusion(x2, w2, b2, g2, bt2, m2, v2,
                        time_tile=8, x_block_budget_bytes=12 * 1024))
    ref2 = _reference(x2, w2, b2, g2, bt2, m2, v2)
    assert out2.shape == (N2, CO2, T2)
    assert jnp.allclose(out2, ref2, atol=1e-4, rtol=1e-4)

    print("KERNEL_OK")
</pallas_src>

<mosaic_0001>
module attributes {stable_mosaic.version = 11 : i64} {
  func.func @_fusion_kernel(%arg0: i32, %arg1: i32, %arg2: i32, %arg3: memref<1x4x16x18xf32, #tpu.memory_space<vmem>>, %arg4: memref<4x18x128xf32, #tpu.memory_space<vmem>>, %arg5: memref<1x128xf32, #tpu.memory_space<vmem>>, %arg6: memref<1x16x128xf32, #tpu.memory_space<vmem>>, %arg7: memref<16x128xf32, #tpu.memory_space<vmem>>) attributes {dimension_semantics = [#tpu.dimension_semantics<parallel>, #tpu.dimension_semantics<parallel>, #tpu.dimension_semantics<arbitrary>], iteration_bounds = array<i64: 2, 1, 1>, scalar_prefetch = 0 : i64, scratch_operands = 1 : i64, tpu.core_type = #tpu.core_type<tc>, window_params = [{transform_indices = @transform_0, window_bounds = array<i64: 1, 4, 16, 18>}, {transform_indices = @transform_1, window_bounds = array<i64: 4, 18, 128>}, {pipeline_mode = #tpu.pipeline_mode<synchronous>, transform_indices = @transform_2, window_bounds = array<i64: 1, 128>}, {transform_indices = @transform_3, window_bounds = array<i64: 1, 16, 128>}]} {
    %c0_i32 = arith.constant 0 : i32
    %0 = arith.cmpi eq, %arg2, %c0_i32 : i32
    %1 = arith.extui %0 : i1 to i32
    %c0_i32_0 = arith.constant 0 : i32
    %2 = arith.cmpi ne, %1, %c0_i32_0 : i32
    scf.if %2 {
      %cst_30 = arith.constant 0.000000e+00 : f32
      %40 = vector.broadcast %cst_30 : f32 to vector<16x128xf32>
      %c0_31 = arith.constant 0 : index
      %c0_32 = arith.constant 0 : index
      %41 = vector.load %arg7[%c0_31, %c0_32] : memref<16x128xf32, #tpu.memory_space<vmem>>, vector<16x128xf32>
      tpu.vector_store %arg7[%c0_31, %c0_32], %40 {strides = array<i32>} : memref<16x128xf32, #tpu.memory_space<vmem>>, vector<16x128xf32>,
    } else {
    }
    %c0 = arith.constant 0 : index
    %c0_1 = arith.constant 0 : index
    %3 = vector.load %arg7[%c0, %c0_1] : memref<16x128xf32, #tpu.memory_space<vmem>>, vector<16x128xf32>
    %c0_i32_2 = arith.constant 0 : i32
    %c0_3 = arith.constant 0 : index
    %4 = arith.index_cast %c0_i32_2 : i32 to index
    %c0_4 = arith.constant 0 : index
    %c0_5 = arith.constant 0 : index
    %5 = vector.load %arg3[%c0_3, %4, %c0_4, %c0_5] : memref<1x4x16x18xf32, #tpu.memory_space<vmem>>, vector<1x1x16x18xf32>
    %6 = vector.shape_cast %5 : vector<1x1x16x18xf32> to vector<16x18xf32>
    %7 = arith.index_cast %c0_i32_2 : i32 to index
    %c0_6 = arith.constant 0 : index
    %c0_7 = arith.constant 0 : index
    %8 = vector.load %arg4[%7, %c0_6, %c0_7] : memref<4x18x128xf32, #tpu.memory_space<vmem>>, vector<1x18x128xf32>
    %9 = vector.shape_cast %8 : vector<1x18x128xf32> to vector<18x128xf32>
    %cst = arith.constant dense<0.000000e+00> : vector<16x128xf32>
    %10 = tpu.matmul %6, %9, %cst {dimension_numbers = #tpu.dot_dimension_numbers<[1], [0], [0], [1], [0, 0, 1, 1], [], []>} : vector<16x18xf32>, vector<18x128xf32>, vector<16x128xf32> -> vector<16x128xf32>
    %11 = arith.addf %3, %10 : vector<16x128xf32>
    %c1_i32 = arith.constant 1 : i32
    %c0_8 = arith.constant 0 : index
    %12 = arith.index_cast %c1_i32 : i32 to index
    %c0_9 = arith.constant 0 : index
    %c0_10 = arith.constant 0 : index
    %13 = vector.load %arg3[%c0_8, %12, %c0_9, %c0_10] : memref<1x4x16x18xf32, #tpu.memory_space<vmem>>, vector<1x1x16x18xf32>
    %14 = vector.shape_cast %13 : vector<1x1x16x18xf32> to vector<16x18xf32>
    %15 = arith.index_cast %c1_i32 : i32 to index
    %c0_11 = arith.constant 0 : index
    %c0_12 = arith.constant 0 : index
    %16 = vector.load %arg4[%15, %c0_11, %c0_12] : memref<4x18x128xf32, #tpu.memory_space<vmem>>, vector<1x18x128xf32>
    %17 = vector.shape_cast %16 : vector<1x18x128xf32> to vector<18x128xf32>
    %cst_13 = arith.constant dense<0.000000e+00> : vector<16x128xf32>
    %18 = tpu.matmul %14, %17, %cst_13 {dimension_numbers = #tpu.dot_dimension_numbers<[1], [0], [0], [1], [0, 0, 1, 1], [], []>} : vector<16x18xf32>, vector<18x128xf32>, vector<16x128xf32> -> vector<16x128xf32>
    %19 = arith.addf %11, %18 : vector<16x128xf32>
    %c2_i32 = arith.constant 2 : i32
    %c0_14 = arith.constant 0 : index
    %20 = arith.index_cast %c2_i32 : i32 to index
    %c0_15 = arith.constant 0 : index
    %c0_16 = arith.constant 0 : index
    %21 = vector.load %arg3[%c0_14, %20, %c0_15, %c0_16] : memref<1x4x16x18xf32, #tpu.memory_space<vmem>>, vector<1x1x16x18xf32>
    %22 = vector.shape_cast %21 : vector<1x1x16x18xf32> to vector<16x18xf32>
    %23 = arith.index_cast %c2_i32 : i32 to index
    %c0_17 = arith.constant 0 : index
    %c0_18 = arith.constant 0 : index
    %24 = vector.load %arg4[%23, %c0_17, %c0_18] : memref<4x18x128xf32, #tpu.memory_space<vmem>>, vector<1x18x128xf32>
    %25 = vector.shape_cast %24 : vector<1x18x128xf32> to vector<18x128xf32>
    %cst_19 = arith.constant dense<0.000000e+00> : vector<16x128xf32>
    %26 = tpu.matmul %22, %25, %cst_19 {dimension_numbers = #tpu.dot_dimension_numbers<[1], [0], [0], [1], [0, 0, 1, 1], [], []>} : vector<16x18xf32>, vector<18x128xf32>, vector<16x128xf32> -> vector<16x128xf32>
    %27 = arith.addf %19, %26 : vector<16x128xf32>
    %c3_i32 = arith.constant 3 : i32
    %c0_20 = arith.constant 0 : index
    %28 = arith.index_cast %c3_i32 : i32 to index
    %c0_21 = arith.constant 0 : index
    %c0_22 = arith.constant 0 : index
    %29 = vector.load %arg3[%c0_20, %28, %c0_21, %c0_22] : memref<1x4x16x18xf32, #tpu.memory_space<vmem>>, vector<1x1x16x18xf32>
    %30 = vector.shape_cast %29 : vector<1x1x16x18xf32> to vector<16x18xf32>
    %31 = arith.index_cast %c3_i32 : i32 to index
    %c0_23 = arith.constant 0 : index
    %c0_24 = arith.constant 0 : index
    %32 = vector.load %arg4[%31, %c0_23, %c0_24] : memref<4x18x128xf32, #tpu.memory_space<vmem>>, vector<1x18x128xf32>
    %33 = vector.shape_cast %32 : vector<1x18x128xf32> to vector<18x128xf32>
    %cst_25 = arith.constant dense<0.000000e+00> : vector<16x128xf32>
    %34 = tpu.matmul %30, %33, %cst_25 {dimension_numbers = #tpu.dot_dimension_numbers<[1], [0], [0], [1], [0, 0, 1, 1], [], []>} : vector<16x18xf32>, vector<18x128xf32>, vector<16x128xf32> -> vector<16x128xf32>
    %35 = arith.addf %27, %34 : vector<16x128xf32>
    %c4_i32 = arith.constant 4 : i32
    %c0_26 = arith.constant 0 : index
    %c0_27 = arith.constant 0 : index
    %36 = vector.load %arg7[%c0_26, %c0_27] : memref<16x128xf32, #tpu.memory_space<vmem>>, vector<16x128xf32>
    tpu.vector_store %arg7[%c0_26, %c0_27], %35 {strides = array<i32>} : memref<16x128xf32, #tpu.memory_space<vmem>>, vector<16x128xf32>,
    %c0_i32_28 = arith.constant 0 : i32
    %37 = arith.cmpi eq, %arg2, %c0_i32_28 : i32
    %38 = arith.extui %37 : i1 to i32
    %c0_i32_29 = arith.constant 0 : i32
    %39 = arith.cmpi ne, %38, %c0_i32_29 : i32
    scf.if %39 {
      %c0_30 = arith.constant 0 : index
      %c0_31 = arith.constant 0 : index
      %40 = vector.load %arg7[%c0_30, %c0_31] : memref<16x128xf32, #tpu.memory_space<vmem>>, vector<16x128xf32>
      %c0_32 = arith.constant 0 : index
      %c0_33 = arith.constant 0 : index
      %41 = vector.load %arg5[%c0_32, %c0_33] : memref<1x128xf32, #tpu.memory_space<vmem>>, vector<1x128xf32>
      %42 = vector.broadcast %41 : vector<1x128xf32> to vector<16x128xf32>
      %43 = arith.addf %40, %42 : vector<16x128xf32>
      %cst_34 = arith.constant 0.000000e+00 : f32
      %44 = vector.broadcast %cst_34 : f32 to vector<16x128xf32>
      %45 = arith.maximumf %43, %44 : vector<16x128xf32>
      %c0_35 = arith.constant 0 : index
      %c0_36 = arith.constant 0 : index
      %c0_37 = arith.constant 0 : index
      %46 = vector.load %arg6[%c0_35, %c0_36, %c0_37] : memref<1x16x128xf32, #tpu.memory_space<vmem>>, vector<1x16x128xf32>
      %47 = vector.shape_cast %46 : vector<1x16x128xf32> to vector<16x128xf32>
      %48 = vector.shape_cast %45 : vector<16x128xf32> to vector<1x16x128xf32>
      tpu.vector_store %arg6[%c0_35, %c0_36, %c0_37], %48 {strides = array<i32>} : memref<1x16x128xf32, #tpu.memory_space<vmem>>, vector<1x16x128xf32>,
    } else {
    }
    return
  }
  func.func @transform_0(%arg0: i32, %arg1: i32, %arg2: i32) -> (i32, i32, i32, i32) {
    %c0_i32 = arith.constant 0 : i32
    %c0_i32_0 = arith.constant 0 : i32
    return %arg0, %arg2, %arg1, %c0_i32 : i32, i32, i32, i32
  }
  func.func @transform_1(%arg0: i32, %arg1: i32, %arg2: i32) -> (i32, i32, i32) {
    %c0_i32 = arith.constant 0 : i32
    %c0_i32_0 = arith.constant 0 : i32
    %c0_i32_1 = arith.constant 0 : i32
    return %arg2, %c0_i32, %c0_i32_0 : i32, i32, i32
  }
  func.func @transform_2(%arg0: i32, %arg1: i32, %arg2: i32) -> (i32, i32) {
    %c0_i32 = arith.constant 0 : i32
    %c0_i32_0 = arith.constant 0 : i32
    %c0_i32_1 = arith.constant 0 : i32
    return %c0_i32, %c0_i32_0 : i32, i32
  }
  func.func @transform_3(%arg0: i32, %arg1: i32, %arg2: i32) -> (i32, i32, i32) {
    %c0_i32 = arith.constant 0 : i32
    %c0_i32_0 = arith.constant 0 : i32
    return %arg0, %arg1, %c0_i32 : i32, i32, i32
  }
}

</mosaic_0001>

<llo_original>
// kernel: tpu_custom_call.1
$region0: #{tpu_custom_call.1}
  #allocation0 [shape = 'u32[]', space=smem, size = 0x4, offset = 0x4, fixed_abs, tag = 'smem constant byte address 0x4 - core index']
  #allocation1 [shape = 'u32[144,128]{1,0:T(1,128)}', space=vmem, size = 0x12000, scoped, tag = 'internal scratch']
  #allocation2 [shape = 'f32[16,128]{1,0:T(8,128)}', space=vmem, size = 0x2000, scoped, tag = 'scratch operand']
  %s0 = inlined_call_operand.vmem [shape: f32[2,4,16,18], index: 0, kind: input, shape index: {}]
  %s1 = inlined_call_operand.vmem [shape: f32[4,18,128], index: 1, kind: input, shape index: {}]
  %s2 = inlined_call_operand.vmem [shape: f32[1,128], index: 2, kind: input, shape index: {}]
  %s3 = inlined_call_operand.hbm [shape: f32[2,16,128], index: 3, kind: output, shape index: {}]
  %s4 = sld [smem:[#allocation0]]
  $region53: #{tpu_custom_call.1} parent=0
    _
  %s6 = ssub.s32 1, %s4
  %s7 = scalar_select 0, %s6, %s4
  $region1: #{tpu_custom_call.1} parent=0
    #allocation3 [shape = 'u8[16384]{0}', space=vmem, size = 0x4000, scoped, tag = 'output window, operand 0']
    #allocation4 [shape = 's32[2]{0}', space=sflag, size = 0x8, scoped, tag = 'scoped memory for tpu_custom_call.1']
    %8 = vsyncpa [#allocation4], 0
    %s9 = scalar_lea.sflag [#allocation4], 1
    %10 = vsyncpa %s9, 0
    loop: start=0, step=1, limit=4
    $region2: #{tpu_custom_call.1} parent=1 // loop_pre_header
      _
    $region3: #{tpu_custom_call.1} parent=1 // loop_header
      %s12 = sphi 0, %s16
      %p13 = scmp.ge.s32.totalorder %s12, 4
      %s19 = sphi 0, %s38
      %s20 = sphi 0, %s34
      %s21 = sphi 0, %s30
      %s22 = sphi 0, %s19
      %s23 = sphi 0, %s20
      %s24 = sphi 0, %s21
      %s25 = sphi 0, %s22
      %s26 = sphi 0, %s23
      %s27 = sphi 0, %s24
      %s45 = sphi 0, %s47
      %s48 = sphi 0, %s45
      %s49 = sphi 0, %s48
      %s65 = sphi 0, %s49
      %s71 = sphi 0, %s73
      %s74 = sphi 0, %s71
      %s75 = sphi 0, %s74
      %s91 = sphi 0, %s75
      %s95 = sphi 0, %s95
      %s97 = sphi 0, %s95
      %s98 = sphi 0, %s97
      %s112 = sphi 0, %s98
      %s120 = sphi 0, %s122
      %s123 = sphi 0, %s120
      %s124 = sphi 0, %s123
      %s140 = sphi 0, %s124
    $region4: #{tpu_custom_call.1} parent=1 // loop_header_branch
      %15 = sbr.rel (%p13) target = $region8
    $region5: #{tpu_custom_call.1} parent=1 // loop_body
      %s17 = ssub.s32 %s12, 1
      %s18 = ssub.s32 %s12, 2
      %s28 = sadd.s32 1, %s21
      %p29 = scmp.ge.s32.totalorder %s28, 1
      %s30 = scalar_select %p29, 0, %s28
      %s31 = sadd.s32 1, %s20
      %s32 = scalar_select %p29, %s31, %s20
      %p33 = scmp.ge.s32.totalorder %s32, 1
      %s34 = scalar_select %p33, 0, %s32
      %s35 = sadd.s32 1, %s19
      %s36 = scalar_select %p33, %s35, %s19
      %p37 = scmp.ge.s32.totalorder %s36, 2
      %s38 = scalar_select %p37, 0, %s36
      %s39 = ssub.s32 %s19, %s38
      %s40 = ssub.s32 %s21, %s30
      %s41 = sor.u32 %s39, %s40
      %s42 = ssub.s32 %s20, %s34
      %s43 = sor.u32 %s41, %s42
      %p44 = scmp.eq.s32.totalorder %s43, 0
      %s46 = sadd.s32 %s45, 1
      %s47 = scalar_select %p44, %s45, %s46
      %p50 = pneg %p44
      %p51 = scmp.eq.s32.totalorder %s12, 1
      %p52 = por %p50, %p51
      %p53 = scmp.ne.s32.totalorder %s45, %s48
      %p54 = scmp.eq.s32.totalorder %s12, 0
      %p55 = por %p53, %p54
      %p56 = scmp.ne.s32.totalorder %s45, %s48
      %p57 = scmp.eq.s32.totalorder %s17, 1
      %p58 = por %p56, %p57
      %p59 = scmp.ne.s32.totalorder %s48, %s49
      %p60 = scmp.eq.s32.totalorder %s17, 0
      %p61 = por %p59, %p60
      %p62 = scmp.ne.s32.totalorder %s48, %s49
      %p63 = scmp.eq.s32.totalorder %s18, 1
      %p64 = por %p62, %p63
      %p66 = scmp.ne.s32.totalorder %s49, %s65
      %p67 = scmp.eq.s32.totalorder %s18, 0
      %p68 = por %p66, %p67
      %s69 = ssub.s32 %s21, %s30
      %p70 = scmp.eq.s32.totalorder %s69, 0
      %s72 = sadd.s32 %s71, 1
      %s73 = scalar_select %p70, %s71, %s72
      %p76 = pneg %p70
      %p77 = scmp.eq.s32.totalorder %s12, 1
      %p78 = por %p76, %p77
      %p79 = scmp.ne.s32.totalorder %s71, %s74
      %p80 = scmp.eq.s32.totalorder %s12, 0
      %p81 = por %p79, %p80
      %p82 = scmp.ne.s32.totalorder %s71, %s74
      %p83 = scmp.eq.s32.totalorder %s17, 1
      %p84 = por %p82, %p83
      %p85 = scmp.ne.s32.totalorder %s74, %s75
      %p86 = scmp.eq.s32.totalorder %s17, 0
      %p87 = por %p85, %p86
      %p88 = scmp.ne.s32.totalorder %s74, %s75
      %p89 = scmp.eq.s32.totalorder %s18, 1
      %p90 = por %p88, %p89
      %p92 = scmp.ne.s32.totalorder %s75, %s91
      %p93 = scmp.eq.s32.totalorder %s18, 0
      %p94 = por %p92, %p93
      %s96 = sadd.s32 %s95, 1
      %p99 = scmp.eq.s32.totalorder %s12, 1
      %p100 = scmp.ne.s32.totalorder %s95, %s97
      %p101 = scmp.eq.s32.totalorder %s12, 0
      %p102 = por %p100, %p101
      %p103 = scmp.ne.s32.totalorder %s95, %s97
      %p104 = scmp.eq.s32.totalorder %s17, 1
      %p105 = por %p103, %p104
      %p106 = scmp.ne.s32.totalorder %s97, %s98
      %p107 = scmp.eq.s32.totalorder %s17, 0
      %p108 = por %p106, %p107
      %p109 = scmp.ne.s32.totalorder %s97, %s98
      %p110 = scmp.eq.s32.totalorder %s18, 1
      %p111 = por %p109, %p110
      %p113 = scmp.ne.s32.totalorder %s98, %s112
      %p114 = scmp.eq.s32.totalorder %s18, 0
      %p115 = por %p113, %p114
      %s116 = ssub.s32 %s19, %s38
      %s117 = ssub.s32 %s20, %s34
      %s118 = sor.u32 %s116, %s117
      %p119 = scmp.eq.s32.totalorder %s118, 0
      %s121 = sadd.s32 %s120, 1
      %s122 = scalar_select %p119, %s120, %s121
      %p125 = pneg %p119
      %p126 = scmp.eq.s32.totalorder %s12, 1
      %p127 = por %p125, %p126
      %p128 = scmp.ne.s32.totalorder %s120, %s123
      %p129 = scmp.eq.s32.totalorder %s12, 0
      %p130 = por %p128, %p129
      %p131 = scmp.ne.s32.totalorder %s120, %s123
      %p132 = scmp.eq.s32.totalorder %s17, 1
      %p133 = por %p131, %p132
      %p134 = scmp.ne.s32.totalorder %s123, %s124
      %p135 = scmp.eq.s32.totalorder %s17, 0
      %p136 = por %p134, %p135
      %p137 = scmp.ne.s32.totalorder %s123, %s124
      %p138 = scmp.eq.s32.totalorder %s18, 1
      %p139 = por %p137, %p138
      %p141 = scmp.ne.s32.totalorder %s124, %s140
      %p142 = scmp.eq.s32.totalorder %s18, 0
      %p143 = por %p141, %p142
      %p144 = scmp.le.s32.totalorder 1, %s12
      %p145 = scmp.lt.s32.totalorder %s12, 3
      %p146 = pnand %p144, %p145
      %p147 = pneg %p146
      // Predicated region
      $region9: #{tpu_custom_call.1} parent=5 // pred_check
        _
      $region10: #{tpu_custom_call.1} parent=5 // pred_check_branch
        %149 = sbr.rel (%p146) target = $region12
      $region11: #{tpu_custom_call.1} parent=5 // pred_region
        %s150 = ssub.s32 %s12, 1
        // Predicated region
        $region13: #{tpu_custom_call.1} parent=11 // pred_check
          %p151 = pneg %p87
        $region14: #{tpu_custom_call.1} parent=11 // pred_check_branch
          %153 = sbr.rel (%p151) target = $region16
        $region15: #{tpu_custom_call.1} parent=11 // pred_region
          %s154 = smul.u32 4, %s24
          %p155 = scmp.lt.s32.totalorder %s154, 3
          %s156 = scalar_select %p155, %s154, 3
          %s157 = smul.addr %s156, 3
          %s158 = smul.addr %s157, 8
          %s159 = scalar_lea.vmem %s1, %s158
          %s160 = smul.u32 4, %s24
        $region16: #{tpu_custom_call.1} parent=11 // pred_fallthru
          _
        // Predicated region
        $region17: #{tpu_custom_call.1} parent=11 // pred_check
          %p161 = pneg %p108
        $region18: #{tpu_custom_call.1} parent=11 // pred_check_branch
          %163 = sbr.rel (%p161) target = $region20
        $region19: #{tpu_custom_call.1} parent=11 // pred_region
          _
        $region20: #{tpu_custom_call.1} parent=11 // pred_fallthru
          _
      $region12: #{tpu_custom_call.1} parent=5 // pred_fallthru
        _
      %p164 = scmp.lt.s32.totalorder %s12, 2
      // Predicated region
      $region21: #{tpu_custom_call.1} parent=5 // pred_check
        %p165 = pneg %p164
      $region22: #{tpu_custom_call.1} parent=5 // pred_check_branch
        %167 = sbr.rel (%p165) target = $region24
      $region23: #{tpu_custom_call.1} parent=5 // pred_region
        // Predicated region
        $region25: #{tpu_custom_call.1} parent=23 // pred_check
          %p168 = pneg %p55
        $region26: #{tpu_custom_call.1} parent=23 // pred_check_branch
          %170 = sbr.rel (%p168) target = $region28
        $region27: #{tpu_custom_call.1} parent=23 // pred_region
          %s171 = smul.u32 4, %s21
          %s172 = smul.u32 2, %s20
          %p173 = scmp.lt.s32.totalorder %s19, 1
          %s174 = scalar_select %p173, %s19, 1
          %p175 = scmp.lt.s32.totalorder %s171, 3
          %s176 = scalar_select %p175, %s171, 3
          %p177 = scmp.lt.s32.totalorder %s172, 1
          %s178 = scalar_select %p177, %s172, 1
          %s179 = smul.addr %s176, 2
          %s180 = sadd.s32 %s178, %s179
          %s181 = smul.addr %s174, 8
          %s182 = sadd.s32 %s180, %s181
          %s183 = smul.addr %s182, 8
          %s184 = scalar_lea.vmem %s0, %s183
          %s185 = smul.u32 4, %s21
          %s186 = smul.u32 2, %s20
        $region28: #{tpu_custom_call.1} parent=23 // pred_fallthru
          _
      $region24: #{tpu_custom_call.1} parent=5 // pred_fallthru
        _
      %p187 = scmp.le.s32.totalorder 1, %s12
      %p188 = scmp.lt.s32.totalorder %s12, 3
      %p189 = pnand %p187, %p188
      %p190 = pneg %p189
      // Predicated region
      $region29: #{tpu_custom_call.1} parent=5 // pred_check
        _
      $region30: #{tpu_custom_call.1} parent=5 // pred_check_branch
        %192 = sbr.rel (%p189) target = $region32
      $region31: #{tpu_custom_call.1} parent=5 // pred_region
        %s193 = ssub.s32 %s12, 1
        %s194 = smul.u32 4, %s24
        %s195 = smul.u32 2, %s23
        %p196 = scmp.lt.s32.totalorder %s22, 1
        %s197 = scalar_select %p196, %s22, 1
        %p198 = scmp.lt.s32.totalorder %s194, 3
        %s199 = scalar_select %p198, %s194, 3
        %p200 = scmp.lt.s32.totalorder %s195, 1
        %s201 = scalar_select %p200, %s195, 1
        %s202 = smul.addr %s199, 2
        %s203 = sadd.s32 %s201, %s202
        %s204 = smul.addr %s197, 8
        %s205 = sadd.s32 %s203, %s204
        %s206 = smul.addr %s205, 8
        %s207 = scalar_lea.vmem %s0, %s206
        %p208 = pneg %p61
        %p209 = pneg %p58
        %s210 = smul.u32 4, %s24
        %p211 = scmp.lt.s32.totalorder %s210, 3
        %s212 = scalar_select %p211, %s210, 3
        %s213 = smul.addr %s212, 3
        %s214 = smul.addr %s213, 8
        %s215 = scalar_lea.vmem %s1, %s214
        %p216 = pneg %p87
        %p217 = pneg %p84
        %p218 = pneg %p108
        %p219 = pneg %p105
        %p220 = pneg %p136
        %p221 = pneg %p133
        %s222 = sand.u32 %s123, 1
        %s223 = scalar_lea.sflag [#allocation4], %s222
        %s224 = sand.u32 %s123, 1
        %s225 = smul.addr %s224, 16
        %s226 = scalar_lea.vmem [#allocation3], %s225
        %s227 = smul.u32 4, %s24
        %s228 = smul.u32 2, %s23
        %p229 = scmp.lt.s32.totalorder %s22, 1
        %s230 = scalar_select %p229, %s22, 1
        %p231 = scmp.lt.s32.totalorder %s227, 3
        %s232 = scalar_select %p231, %s227, 3
        %p233 = scmp.lt.s32.totalorder %s228, 1
        %s234 = scalar_select %p233, %s228, 1
        %s235 = smul.addr %s232, 2
        %s236 = sadd.s32 %s234, %s235
        %s237 = smul.addr %s230, 8
        %s238 = sadd.s32 %s236, %s237
        %s239 = smul.addr %s238, 8
        %s240 = scalar_lea.vmem %s0, %s239
        %s241 = smul.u32 4, %s24
        %s242 = smul.u32 2, %s23
        %s243 = smul.u32 4, %s24
        %p244 = scmp.lt.s32.totalorder %s243, 3
        %s245 = scalar_select %p244, %s243, 3
        %s246 = smul.addr %s245, 3
        %s247 = smul.addr %s246, 8
        %s248 = scalar_lea.vmem %s1, %s247
        %s249 = smul.u32 4, %s24
        %s250 = smul.u32 2, %s23
        %p251 = scmp.eq.s32.totalorder %s24, 0
        // Predicated region
        $region33: #{tpu_custom_call.1} parent=31 // pred_check
          %p252 = pneg %p251
        $region34: #{tpu_custom_call.1} parent=31 // pred_check_branch
          %254 = sbr.rel (%p252) target = $region36
        $region35: #{tpu_custom_call.1} parent=31 // pred_region
          %255 = vst [vmem:[#allocation2] sm:$0xff] 0.0
          %256 = vst [vmem:[#allocation2 + $0x8] sm:$0xff] 0.0
        $region36: #{tpu_custom_call.1} parent=31 // pred_fallthru
          _
        %v257 = vld [vmem:[#allocation2] sm:$0xff]
        %v258 = vld [vmem:[#allocation2 + $0x8] sm:$0xff]
        %v259 = vld [vmem:[%s240] sm:$0xff]
        %v260 = vld [vmem:[%s240 + $0x8] sm:$0xff]
        %v261 = vld [vmem:[%s248] sm:$0xff]
        %v262 = vld [vmem:[%s248 + $0x8] sm:$0xff]
        %v263 = vld [vmem:[%s248 + $0x10] sm:$0x3]
        %vm264 = vcmask 146432
        %v266 = vsel %vm264, %v259, 0
        %v269 = vsel %vm264, %v260, 0
        %vm271 = vcmask 1041408
        %v273 = vsel %vm271, %v263, 0
        %275 = vmatprep.subr.mxu0 0.0
        %276 = vmatpush1.msra.mxu0 %v261
        %277 = vmatprep.subr.mxu0 0.0
        %278 = vmatpush1.msra.mxu0 %v262
        %279 = vmatprep.subr.mxu0 0.0
        %280 = vmatpush1.msra.mxu0 %v273
        %281 = vmatprep.subr.mxu0 0.0
        %282 = vmatpush1.msra.mxu0 0.0
        %283 = vmatprep.subr.mxu0 0.0
        %284 = vmatpush1.msra.mxu0 0.0
        %285 = vmatprep.subr.mxu0 0.0
        %286 = vmatpush1.msra.mxu0 0.0
        %287 = vmatprep.subr.mxu0 0.0
        %288 = vmatpush1.msra.mxu0 0.0
        %289 = vmatprep.subr.mxu0 0.0
        %290 = vmatpush1.msra.mxu0 0.0
        %291 = vmatprep.subr.mxu0 0.0
        %292 = vmatpush1.msra.mxu0 0.0
        %293 = vmatprep.subr.mxu0 0.0
        %294 = vmatpush1.msra.mxu0 0.0
        %295 = vmatprep.subr.mxu0 0.0
        %296 = vmatpush1.msra.mxu0 0.0
        %297 = vmatprep.subr.mxu0 0.0
        %298 = vmatpush1.msra.mxu0 0.0
        %299 = vmatprep.subr.mxu0 0.0
        %300 = vmatpush1.msra.mxu0 0.0
        %301 = vmatprep.subr.mxu0 0.0
        %302 = vmatpush1.msra.mxu0 0.0
        %303 = vmatprep.subr.mxu0 0.0
        %304 = vmatpush1.msra.mxu0 0.0
        %305 = vmatprep.subr.mxu0 0.0
        %306 = vmatpush1.msra.mxu0 0.0
        %307 = vmatprep.subr.mxu0 0.0
        %308 = vmatpush1.msra.mxu0 0.0
        %309 = vmatprep.subr.mxu0 0.0
        %310 = vmatpush1.msra.mxu0 0.0
        %311 = vmatprep.subr.mxu0 0.0
        %312 = vmatpush1.msra.mxu0 0.0
        %313 = vmatprep.subr.mxu0 0.0
        %314 = vmatpush1.msra.mxu0 0.0
        %315 = vmatprep.subr.mxu0 0.0
        %316 = vmatpush1.msra.mxu0 0.0
        %317 = vmatprep.subr.mxu0 0.0
        %318 = vmatpush1.msra.mxu0 0.0
        %319 = vmatprep.subr.mxu0 0.0
        %320 = vmatpush1.msra.mxu0 0.0
        %321 = vmatprep.subr.mxu0 0.0
        %322 = vmatpush1.msra.mxu0 0.0
        %323 = vmatprep.subr.mxu0 0.0
        %324 = vmatpush1.msra.mxu0 0.0
        %325 = vmatprep.subr.mxu0 0.0
        %326 = vmatpush1.msra.mxu0 0.0
        %327 = vmatprep.subr.mxu0 0.0
        %328 = vmatpush1.msra.mxu0 0.0
        %329 = vmatprep.subr.mxu0 0.0
        %330 = vmatpush1.msra.mxu0 0.0
        %331 = vmatprep.subr.mxu0 0.0
        %332 = vmatpush1.msra.mxu0 0.0
        %333 = vmatprep.subr.mxu0 0.0
        %334 = vmatpush1.msra.mxu0 0.0
        %335 = vmatprep.subr.mxu0 0.0
        %336 = vmatpush1.msra.mxu0 0.0
        %337 = vmatprep.subr.mxu0 0.0
        %338 = vmatpush1.msra.mxu0 0.0
        %339 = vmatprep.mubr.f32.mxu0 0.0
        %340 = vmatmul.mubr.f32.gmra.mrb[0].mxu0 %v266
        %v341 = vpop.f32.mrb[0].mxu0
        %v342 = vadd.f32 0.0, %v341
        %v343 = vpop.f32.mrb[0].mxu0
        %344 = vmatprep.mubr.f32.mxu0 0.0
        %345 = vmatmul.mubr.f32.gmra.mrb[0].mxu0 %v269
        %v346 = vpop.f32.mrb[0].mxu0
        %v347 = vadd.f32 0.0, %v346
        %v348 = vpop.f32.mrb[0].mxu0
        %349 = vdwg.mxu0
        %v350 = vadd.f32 %v257, %v342
        %v351 = vadd.f32 %v258, %v347
        %s352 = scalar_lea.vmem %s240, 16
        %v353 = vld [vmem:[%s352] sm:$0xff]
        %v354 = vld [vmem:[%s352 + $0x8] sm:$0xff]
        %s355 = scalar_lea.vmem %s248, 24
        %v356 = vld [vmem:[%s355] sm:$0xff]
        %v357 = vld [vmem:[%s355 + $0x8] sm:$0xff]
        %v358 = vld [vmem:[%s355 + $0x10] sm:$0x3]
        %v360 = vsel %vm264, %v353, 0
        %v363 = vsel %vm264, %v354, 0
        %v366 = vsel %vm271, %v358, 0
        %368 = vmatprep.subr.mxu0 0.0
        %369 = vmatpush1.msra.mxu0 %v356
        %370 = vmatprep.subr.mxu0 0.0
        %371 = vmatpush1.msra.mxu0 %v357
        %372 = vmatprep.subr.mxu0 0.0
        %373 = vmatpush1.msra.mxu0 %v366
        %374 = vmatprep.subr.mxu0 0.0
        %375 = vmatpush1.msra.mxu0 0.0
        %376 = vmatprep.subr.mxu0 0.0
        %377 = vmatpush1.msra.mxu0 0.0
        %378 = vmatprep.subr.mxu0 0.0
        %379 = vmatpush1.msra.mxu0 0.0
        %380 = vmatprep.subr.mxu0 0.0
        %381 = vmatpush1.msra.mxu0 0.0
        %382 = vmatprep.subr.mxu0 0.0
        %383 = vmatpush1.msra.mxu0 0.0
        %384 = vmatprep.subr.mxu0 0.0
        %385 = vmatpush1.msra.mxu0 0.0
        %386 = vmatprep.subr.mxu0 0.0
        %387 = vmatpush1.msra.mxu0 0.0
        %388 = vmatprep.subr.mxu0 0.0
        %389 = vmatpush1.msra.mxu0 0.0
        %390 = vmatprep.subr.mxu0 0.0
        %391 = vmatpush1.msra.mxu0 0.0
        %392 = vmatprep.subr.mxu0 0.0
        %393 = vmatpush1.msra.mxu0 0.0
        %394 = vmatprep.subr.mxu0 0.0
        %395 = vmatpush1.msra.mxu0 0.0
        %396 = vmatprep.subr.mxu0 0.0
        %397 = vmatpush1.msra.mxu0 0.0
        %398 = vmatprep.subr.mxu0 0.0
        %399 = vmatpush1.msra.mxu0 0.0
        %400 = vmatprep.subr.mxu0 0.0
        %401 = vmatpush1.msra.mxu0 0.0
        %402 = vmatprep.subr.mxu0 0.0
        %403 = vmatpush1.msra.mxu0 0.0
        %404 = vmatprep.subr.mxu0 0.0
        %405 = vmatpush1.msra.mxu0 0.0
        %406 = vmatprep.subr.mxu0 0.0
        %407 = vmatpush1.msra.mxu0 0.0
        %408 = vmatprep.subr.mxu0 0.0
        %409 = vmatpush1.msra.mxu0 0.0
        %410 = vmatprep.subr.mxu0 0.0
        %411 = vmatpush1.msra.mxu0 0.0
        %412 = vmatprep.subr.mxu0 0.0
        %413 = vmatpush1.msra.mxu0 0.0
        %414 = vmatprep.subr.mxu0 0.0
        %415 = vmatpush1.msra.mxu0 0.0
        %416 = vmatprep.subr.mxu0 0.0
        %417 = vmatpush1.msra.mxu0 0.0
        %418 = vmatprep.subr.mxu0 0.0
        %419 = vmatpush1.msra.mxu0 0.0
        %420 = vmatprep.subr.mxu0 0.0
        %421 = vmatpush1.msra.mxu0 0.0
        %422 = vmatprep.subr.mxu0 0.0
        %423 = vmatpush1.msra.mxu0 0.0
        %424 = vmatprep.subr.mxu0 0.0
        %425 = vmatpush1.msra.mxu0 0.0
        %426 = vmatprep.subr.mxu0 0.0
        %427 = vmatpush1.msra.mxu0 0.0
        %428 = vmatprep.subr.mxu0 0.0
        %429 = vmatpush1.msra.mxu0 0.0
        %430 = vmatprep.subr.mxu0 0.0
        %431 = vmatpush1.msra.mxu0 0.0
        %432 = vmatprep.mubr.f32.mxu0 0.0
        %433 = vmatmul.mubr.f32.gmra.mrb[0].mxu0 %v360
        %v434 = vpop.f32.mrb[0].mxu0
        %v435 = vadd.f32 0.0, %v434
        %v436 = vpop.f32.mrb[0].mxu0
        %437 = vmatprep.mubr.f32.mxu0 0.0
        %438 = vmatmul.mubr.f32.gmra.mrb[0].mxu0 %v363
        %v439 = vpop.f32.mrb[0].mxu0
        %v440 = vadd.f32 0.0, %v439
        %v441 = vpop.f32.mrb[0].mxu0
        %442 = vdwg.mxu0
        %v443 = vadd.f32 %v350, %v435
        %v444 = vadd.f32 %v351, %v440
        %s445 = scalar_lea.vmem %s240, 32
        %v446 = vld [vmem:[%s445] sm:$0xff]
        %v447 = vld [vmem:[%s445 + $0x8] sm:$0xff]
        %s448 = scalar_lea.vmem %s248, 48
        %v449 = vld [vmem:[%s448] sm:$0xff]
        %v450 = vld [vmem:[%s448 + $0x8] sm:$0xff]
        %v451 = vld [vmem:[%s448 + $0x10] sm:$0x3]
        %v453 = vsel %vm264, %v446, 0
        %v456 = vsel %vm264, %v447, 0
        %v459 = vsel %vm271, %v451, 0
        %461 = vmatprep.subr.mxu0 0.0
        %462 = vmatpush1.msra.mxu0 %v449
        %463 = vmatprep.subr.mxu0 0.0
        %464 = vmatpush1.msra.mxu0 %v450
        %465 = vmatprep.subr.mxu0 0.0
        %466 = vmatpush1.msra.mxu0 %v459
        %467 = vmatprep.subr.mxu0 0.0
        %468 = vmatpush1.msra.mxu0 0.0
        %469 = vmatprep.subr.mxu0 0.0
        %470 = vmatpush1.msra.mxu0 0.0
        %471 = vmatprep.subr.mxu0 0.0
        %472 = vmatpush1.msra.mxu0 0.0
        %473 = vmatprep.subr.mxu0 0.0
        %474 = vmatpush1.msra.mxu0 0.0
        %475 = vmatprep.subr.mxu0 0.0
        %476 = vmatpush1.msra.mxu0 0.0
        %477 = vmatprep.subr.mxu0 0.0
        %478 = vmatpush1.msra.mxu0 0.0
        %479 = vmatprep.subr.mxu0 0.0
        %480 = vmatpush1.msra.mxu0 0.0
        %481 = vmatprep.subr.mxu0 0.0
        %482 = vmatpush1.msra.mxu0 0.0
        %483 = vmatprep.subr.mxu0 0.0
        %484 = vmatpush1.msra.mxu0 0.0
        %485 = vmatprep.subr.mxu0 0.0
        %486 = vmatpush1.msra.mxu0 0.0
        %487 = vmatprep.subr.mxu0 0.0
        %488 = vmatpush1.msra.mxu0 0.0
        %489 = vmatprep.subr.mxu0 0.0
        %490 = vmatpush1.msra.mxu0 0.0
        %491 = vmatprep.subr.mxu0 0.0
        %492 = vmatpush1.msra.mxu0 0.0
        %493 = vmatprep.subr.mxu0 0.0
        %494 = vmatpush1.msra.mxu0 0.0
        %495 = vmatprep.subr.mxu0 0.0
        %496 = vmatpush1.msra.mxu0 0.0
        %497 = vmatprep.subr.mxu0 0.0
        %498 = vmatpush1.msra.mxu0 0.0
        %499 = vmatprep.subr.mxu0 0.0
        %500 = vmatpush1.msra.mxu0 0.0
        %501 = vmatprep.subr.mxu0 0.0
        %502 = vmatpush1.msra.mxu0 0.0
        %503 = vmatprep.subr.mxu0 0.0
        %504 = vmatpush1.msra.mxu0 0.0
        %505 = vmatprep.subr.mxu0 0.0
        %506 = vmatpush1.msra.mxu0 0.0
        %507 = vmatprep.subr.mxu0 0.0
        %508 = vmatpush1.msra.mxu0 0.0
        %509 = vmatprep.subr.mxu0 0.0
        %510 = vmatpush1.msra.mxu0 0.0
        %511 = vmatprep.subr.mxu0 0.0
        %512 = vmatpush1.msra.mxu0 0.0
        %513 = vmatprep.subr.mxu0 0.0
        %514 = vmatpush1.msra.mxu0 0.0
        %515 = vmatprep.subr.mxu0 0.0
        %516 = vmatpush1.msra.mxu0 0.0
        %517 = vmatprep.subr.mxu0 0.0
        %518 = vmatpush1.msra.mxu0 0.0
        %519 = vmatprep.subr.mxu0 0.0
        %520 = vmatpush1.msra.mxu0 0.0
        %521 = vmatprep.subr.mxu0 0.0
        %522 = vmatpush1.msra.mxu0 0.0
        %523 = vmatprep.subr.mxu0 0.0
        %524 = vmatpush1.msra.mxu0 0.0
        %525 = vmatprep.mubr.f32.mxu0 0.0
        %526 = vmatmul.mubr.f32.gmra.mrb[0].mxu0 %v453
        %v527 = vpop.f32.mrb[0].mxu0
        %v528 = vadd.f32 0.0, %v527
        %v529 = vpop.f32.mrb[0].mxu0
        %530 = vmatprep.mubr.f32.mxu0 0.0
        %531 = vmatmul.mubr.f32.gmra.mrb[0].mxu0 %v456
        %v532 = vpop.f32.mrb[0].mxu0
        %v533 = vadd.f32 0.0, %v532
        %v534 = vpop.f32.mrb[0].mxu0
        %535 = vdwg.mxu0
        %v536 = vadd.f32 %v443, %v528
        %v537 = vadd.f32 %v444, %v533
        %s538 = scalar_lea.vmem %s240, 48
        %v539 = vld [vmem:[%s538] sm:$0xff]
        %v540 = vld [vmem:[%s538 + $0x8] sm:$0xff]
        %s541 = scalar_lea.vmem %s248, 72
        %v542 = vld [vmem:[%s541] sm:$0xff]
        %v543 = vld [vmem:[%s541 + $0x8] sm:$0xff]
        %v544 = vld [vmem:[%s541 + $0x10] sm:$0x3]
        %v546 = vsel %vm264, %v539, 0
        %v549 = vsel %vm264, %v540, 0
        %v552 = vsel %vm271, %v544, 0
        %554 = vmatprep.subr.mxu0 0.0
        %555 = vmatpush1.msra.mxu0 %v542
        %556 = vmatprep.subr.mxu0 0.0
        %557 = vmatpush1.msra.mxu0 %v543
        %558 = vmatprep.subr.mxu0 0.0
        %559 = vmatpush1.msra.mxu0 %v552
        %560 = vmatprep.subr.mxu0 0.0
        %561 = vmatpush1.msra.mxu0 0.0
        %562 = vmatprep.subr.mxu0 0.0
        %563 = vmatpush1.msra.mxu0 0.0
        %564 = vmatprep.subr.mxu0 0.0
        %565 = vmatpush1.msra.mxu0 0.0
        %566 = vmatprep.subr.mxu0 0.0
        %567 = vmatpush1.msra.mxu0 0.0
        %568 = vmatprep.subr.mxu0 0.0
        %569 = vmatpush1.msra.mxu0 0.0
        %570 = vmatprep.subr.mxu0 0.0
        %571 = vmatpush1.msra.mxu0 0.0
        %572 = vmatprep.subr.mxu0 0.0
        %573 = vmatpush1.msra.mxu0 0.0
        %574 = vmatprep.subr.mxu0 0.0
        %575 = vmatpush1.msra.mxu0 0.0
        %576 = vmatprep.subr.mxu0 0.0
        %577 = vmatpush1.msra.mxu0 0.0
        %578 = vmatprep.subr.mxu0 0.0
        %579 = vmatpush1.msra.mxu0 0.0
        %580 = vmatprep.subr.mxu0 0.0
        %581 = vmatpush1.msra.mxu0 0.0
        %582 = vmatprep.subr.mxu0 0.0
        %583 = vmatpush1.msra.mxu0 0.0
        %584 = vmatprep.subr.mxu0 0.0
        %585 = vmatpush1.msra.mxu0 0.0
        %586 = vmatprep.subr.mxu0 0.0
        %587 = vmatpush1.msra.mxu0 0.0
        %588 = vmatprep.subr.mxu0 0.0
        %589 = vmatpush1.msra.mxu0 0.0
        %590 = vmatprep.subr.mxu0 0.0
        %591 = vmatpush1.msra.mxu0 0.0
        %592 = vmatprep.subr.mxu0 0.0
        %593 = vmatpush1.msra.mxu0 0.0
        %594 = vmatprep.subr.mxu0 0.0
        %595 = vmatpush1.msra.mxu0 0.0
        %596 = vmatprep.subr.mxu0 0.0
        %597 = vmatpush1.msra.mxu0 0.0
        %598 = vmatprep.subr.mxu0 0.0
        %599 = vmatpush1.msra.mxu0 0.0
        %600 = vmatprep.subr.mxu0 0.0
        %601 = vmatpush1.msra.mxu0 0.0
        %602 = vmatprep.subr.mxu0 0.0
        %603 = vmatpush1.msra.mxu0 0.0
        %604 = vmatprep.subr.mxu0 0.0
        %605 = vmatpush1.msra.mxu0 0.0
        %606 = vmatprep.subr.mxu0 0.0
        %607 = vmatpush1.msra.mxu0 0.0
        %608 = vmatprep.subr.mxu0 0.0
        %609 = vmatpush1.msra.mxu0 0.0
        %610 = vmatprep.subr.mxu0 0.0
        %611 = vmatpush1.msra.mxu0 0.0
        %612 = vmatprep.subr.mxu0 0.0
        %613 = vmatpush1.msra.mxu0 0.0
        %614 = vmatprep.subr.mxu0 0.0
        %615 = vmatpush1.msra.mxu0 0.0
        %616 = vmatprep.subr.mxu0 0.0
        %617 = vmatpush1.msra.mxu0 0.0
        %618 = vmatprep.mubr.f32.mxu0 0.0
        %619 = vmatmul.mubr.f32.gmra.mrb[0].mxu0 %v546
        %v620 = vpop.f32.mrb[0].mxu0
        %v621 = vadd.f32 0.0, %v620
        %v622 = vpop.f32.mrb[0].mxu0
        %623 = vmatprep.mubr.f32.mxu0 0.0
        %624 = vmatmul.mubr.f32.gmra.mrb[0].mxu0 %v549
        %v625 = vpop.f32.mrb[0].mxu0
        %v626 = vadd.f32 0.0, %v625
        %v627 = vpop.f32.mrb[0].mxu0
        %628 = vdwg.mxu0
        %v629 = vadd.f32 %v536, %v621
        %v630 = vadd.f32 %v537, %v626
        %631 = vst [vmem:[#allocation2] sm:$0xff] %v629
        %632 = vst [vmem:[#allocation2 + $0x8] sm:$0xff] %v630
        // Predicated region
        $region37: #{tpu_custom_call.1} parent=31 // pred_check
          %p633 = pneg %p251
        $region38: #{tpu_custom_call.1} parent=31 // pred_check_branch
          %635 = sbr.rel (%p633) target = $region40
        $region39: #{tpu_custom_call.1} parent=31 // pred_region
          %v636 = vld [vmem:[#allocation2] sm:$0xff]
          %v637 = vld [vmem:[#allocation2 + $0x8] sm:$0xff]
          %v638 = vld [vmem:[%s2] sm:$0x1]
          %v640 = vlaneseq
          %v641 = vshrl.u32 %v640, 7
          %v642 = vsub.s32 0, %v641
          %v643 = vrot.slane %v638, %v642
          %v645 = vadd.f32 %v636, %v643
          %v646 = vadd.f32 %v637, %v643
          %v647 = vmax.f32 %v645, 0.0
          %v648 = vmax.f32 %v646, 0.0
          %649 = vst [vmem:[%s226] sm:$0xff] %v647
          %650 = vst [vmem:[%s226 + $0x8] sm:$0xff] %v648
        $region40: #{tpu_custom_call.1} parent=31 // pred_fallthru
          _
        %s651 = sand.u32 %s123, 1
        %s652 = scalar_lea.sflag [#allocation4], %s651
        %s653 = sand.u32 %s123, 1
        %s654 = smul.addr %s653, 16
        %s655 = scalar_lea.vmem [#allocation3], %s654
        // Predicated region
        $region41: #{tpu_custom_call.1} parent=31 // pred_check
          %p656 = pneg %p133
        $region42: #{tpu_custom_call.1} parent=31 // pred_check_branch
          %658 = sbr.rel (%p656) target = $region44
        $region43: #{tpu_custom_call.1} parent=31 // pred_region
          %s659 = smul.u32 2, %s23
          %s661 = ssub.s32 256, 256
          %662 = vsyncadd %s652, %s661
          %s663 = smul.addr %s22, 2
          %s664 = sadd.s32 %s659, %s663
          %s665 = smul.addr %s664, 128
          %s666 = scalar_lea.hbm %s3, %s665
          %s667 = sshll.u32 %s655, 4
          %s668 = int_to_ptr.vmem [resolvable:$true] %s667
          %673 = dma.vmem_to_hbm [thread:$0]  %s668, 256, %s666, %s652, 128, 128, 8
        $region44: #{tpu_custom_call.1} parent=31 // pred_fallthru
          _
      $region32: #{tpu_custom_call.1} parent=5 // pred_fallthru
        _
      %p674 = scmp.le.s32.totalorder 2, %s12
      // Predicated region
      $region45: #{tpu_custom_call.1} parent=5 // pred_check
        %p675 = pneg %p674
      $region46: #{tpu_custom_call.1} parent=5 // pred_check_branch
        %677 = sbr.rel (%p675) target = $region48
      $region47: #{tpu_custom_call.1} parent=5 // pred_region
        %s678 = ssub.s32 %s12, 2
        // Predicated region
        $region49: #{tpu_custom_call.1} parent=47 // pred_check
          %p679 = pneg %p139
        $region50: #{tpu_custom_call.1} parent=47 // pred_check_branch
          %681 = sbr.rel (%p679) target = $region52
        $region51: #{tpu_custom_call.1} parent=47 // pred_region
          %s682 = sand.u32 %s124, 1
          %s683 = scalar_lea.sflag [#allocation4], %s682
          %s684 = sand.u32 %s124, 1
          %s685 = smul.addr %s684, 16
          %s686 = scalar_lea.vmem [#allocation3], %s685
          %687 = dma.done %s683, 256
        $region52: #{tpu_custom_call.1} parent=47 // pred_fallthru
          _
      $region48: #{tpu_custom_call.1} parent=5 // pred_fallthru
        _
    $region6: #{tpu_custom_call.1} parent=1 // loop_footer
      %s16 = sadd.s32 1, %s12
    $region7: #{tpu_custom_call.1} parent=1 // loop_footer_branch
      %11 = sbr.rel target = $region3
    $region8: #{tpu_custom_call.1} parent=1 // loop_exit
      _
    %688 = vsyncpa [#allocation4], 1
    %s689 = scalar_lea.sflag [#allocation4], 1
    %690 = vsyncpa %s689, 1

</llo_original>
